<compile_context>
chip_gen: v6e
topology: v6e:2x2x1
jax: 0.10.0
libtpu: 0.0.40
codegen_flags: <defaults>
</compile_context>

<pallas_src>
import jax
import jax.numpy as jnp
from jax.experimental import pallas as pl
from jax.experimental.pallas import tpu as pltpu


def _round_up(x, m):
    return (x + m - 1) // m * m


def seq2seq_kernel(ids_ref, m1_ref, b1_ref, w2_ref, b2_ref, out_ref):
    """One grid step processes a tile of TB batch rows.

    ids_ref : (L*TB, 1) int32  -- token ids for this tile, l-major (row = l*TB + b)
    m1_ref  : (Vp, Hp)  bf16   -- folded table: emb_table @ W1 (parameter-only)
    b1_ref  : (1, Hp)   f32
    w2_ref  : (Hp, Cp)  bf16
    b2_ref  : (1, Cp)   f32
    out_ref : (TB, Cp)  f32
    """
    rows = ids_ref.shape[0]            # L * TB
    tb = out_ref.shape[0]
    seq_len = rows // tb
    vpad = m1_ref.shape[0]

    # --- fused embedding gather + first Linear via one-hot MXU matmul ------------
    # one_hot[r, v] = (ids[r] == v); (L*TB, Vp) @ (Vp, Hp) on the MXU replaces the
    # scalar-serialized per-row gather *and* the first Linear (M1 = emb @ W1 was
    # folded in the wrapper).
    ids = ids_ref[...]                                              # (rows, 1) int32
    iota_v = jax.lax.broadcasted_iota(jnp.int32, (rows, vpad), 1)
    one_hot = jnp.where(iota_v == ids, 1.0, 0.0).astype(jnp.bfloat16)   # (rows, Vp)
    h = jnp.dot(one_hot, m1_ref[...],
                preferred_element_type=jnp.float32)                 # (rows, Hp) f32
    h = jnp.maximum(h + b1_ref[...], 0.0)

    # --- max over sequence positions ---------------------------------------------
    # Rows are l-major and TB is a multiple of 8, so every slice falls on a sublane
    # boundary -> straight VPU vmax (no XLU sublane selects).
    # TODO(synk): for non-toy seq_len, switch this static unroll to lax.fori_loop.
    m = h[0:tb, :]
    for l in range(1, seq_len):
        m = jnp.maximum(m, h[l * tb:(l + 1) * tb, :])                # (TB, Hp)

    # --- output projection; Cp is a lane-dense 128 multiple -----------------------
    o = jnp.dot(m.astype(jnp.bfloat16), w2_ref[...],
                preferred_element_type=jnp.float32)                  # (TB, Cp)
    out_ref[...] = (o + b2_ref[...]).astype(out_ref.dtype)


def seq2seq_forward(input_seq, emb_table, w1, b1, w2, b2, *, tb=None):
    """input_seq: [B, L] int32. Returns [B, C] float32."""
    B, L = input_seq.shape
    V, _E = emb_table.shape
    H = w1.shape[1]
    C = w2.shape[1]

    # --- batch tile: multiple of 8 (sublane alignment) and >=2 grid steps so the
    #     'parallel' grid axis can shard across v7x's two TensorCores.
    if tb is None:
        tb = min(128, max(8, _round_up(pl.cdiv(B, 2), 8)))
    assert tb % 8 == 0
    b_pad = max(_round_up(B, tb), 2 * tb)
    n_tiles = b_pad // tb

    # --- pad parameter dims to lane-dense 128 multiples. Zero padding keeps the math
    #     exact: padded H columns are 0 after ReLU and multiply zero W2 rows; padded C
    #     columns are sliced off. (On v6e/v7x a 256 multiple fills the MXU better once
    #     H/C grow; 128 is the v5e-friendly minimum and correct everywhere.)
    v_pad = _round_up(V, 128)
    h_pad = _round_up(H, 128)
    c_pad = _round_up(C, 128)

    # --- fold embedding + first Linear: M1 = emb_table @ W1 (parameter-only) -------
    m1 = emb_table.astype(jnp.float32) @ w1.astype(jnp.float32)          # (V, H)
    m1_bf = jnp.zeros((v_pad, h_pad), jnp.float32).at[:V, :H].set(m1).astype(jnp.bfloat16)
    b1_p = jnp.zeros((1, h_pad), jnp.float32).at[0, :H].set(b1.astype(jnp.float32))
    w2_bf = (jnp.zeros((h_pad, c_pad), jnp.float32)
             .at[:H, :C].set(w2.astype(jnp.float32)).astype(jnp.bfloat16))
    b2_p = jnp.zeros((1, c_pad), jnp.float32).at[0, :C].set(b2.astype(jnp.float32))

    # --- ids: clamp (no silent OOB gather), pad batch, lay out per-tile l-major as
    #     (n_tiles*L*tb, 1) so the (L*tb, 1) block is (8,128)-legal and avoids the
    #     2-D SMEM padding trap.
    ids = jnp.clip(input_seq.astype(jnp.int32), 0, V - 1)
    ids_p = jnp.zeros((b_pad, L), jnp.int32).at[:B, :].set(ids)
    ids_lm = (ids_p.reshape(n_tiles, tb, L)
                   .transpose(0, 2, 1)                # (n_tiles, L, tb): l-major
                   .reshape(n_tiles * L * tb, 1))

    # Conservative explicit VMEM cap (actual use is tiny; stays far below v7x's 64 MiB).
    est = (2 * L * tb * 4 + 2 * tb * c_pad * 4 + tb * max(L, 1) * h_pad * 4
           + v_pad * h_pad * 2 + h_pad * c_pad * 2 + (h_pad + c_pad) * 4)
    vmem_limit = int(min(48 * 1024 * 1024, max(16 * 1024 * 1024, 4 * est)))

    # Constants: whole-array VMEM residency, single-buffered (no double-buffering of
    # operands whose block index never changes).
    const_spec = pl.BlockSpec(memory_space=pltpu.MemorySpace.VMEM)
    # NOTE: at realistic vocab sizes the [V, H] table no longer fits VMEM — switch its
    # spec to memory_space=pl.ANY and DMA-gather rows per tile instead.

    out = pl.pallas_call(
        seq2seq_kernel,
        out_shape=jax.ShapeDtypeStruct((b_pad, c_pad), jnp.float32),
        grid_spec=pltpu.PrefetchScalarGridSpec(
            num_scalar_prefetch=0,
            grid=(n_tiles,),
            in_specs=[
                pl.BlockSpec((L * tb, 1), lambda i: (i, 0)),   # ids, per-tile l-major
                const_spec,                                    # M1 = emb @ W1 (bf16)
                const_spec,                                    # b1
                const_spec,                                    # W2 (bf16)
                const_spec,                                    # b2
            ],
            out_specs=pl.BlockSpec((tb, c_pad), lambda i: (i, 0)),
        ),
        compiler_params=pltpu.CompilerParams(
            dimension_semantics=("parallel",),
            vmem_limit_bytes=vmem_limit,
        ),
    )(ids_lm, m1_bf, b1_p, w2_bf, b2_p)
    return out[:B, :C]


def reference_forward(input_seq, emb_table, w1, b1, w2, b2):
    embedded = jnp.take(emb_table, input_seq, axis=0)
    h = jnp.maximum(embedded @ w1 + b1, 0.0)
    m = jnp.max(h, axis=1)
    return m @ w2 + b2


if __name__ == "__main__":
    # Small shapes consistent with the module's forward.
    vocab_size = 50
    emb_size = 32
    hidden_size = 32
    num_classes = 2
    batch = 2
    seq_len = 8

    key = jax.random.PRNGKey(0)
    k_emb, k_w1, k_b1, k_w2, k_b2, k_ids = jax.random.split(key, 6)

    # Deterministic synthetic parameters (shapes from nn.Embedding / nn.Linear).
    emb_table = jax.random.normal(k_emb, (vocab_size, emb_size), jnp.float32) * 0.1
    w1 = jax.random.normal(k_w1, (emb_size, hidden_size), jnp.float32) * 0.1
    b1 = jax.random.normal(k_b1, (hidden_size,), jnp.float32) * 0.1
    w2 = jax.random.normal(k_w2, (hidden_size, num_classes), jnp.float32) * 0.1
    b2 = jax.random.normal(k_b2, (num_classes,), jnp.float32) * 0.1

    input_seq = jax.random.randint(k_ids, (batch, seq_len), 0, vocab_size, jnp.int32)

    out = seq2seq_forward(input_seq, emb_table, w1, b1, w2, b2)
    out = jax.block_until_ready(out)

    ref = reference_forward(input_seq, emb_table, w1, b1, w2, b2)
    assert out.shape == (batch, num_classes)
    # bf16 matmul operands + folded emb@W1 vs the f32 reference -> relaxed tolerance.
    assert jnp.allclose(out, ref, atol=2e-2, rtol=2e-2), (out, ref)

    print("KERNEL_OK")
</pallas_src>

<mosaic_0001>
module attributes {stable_mosaic.version = 11 : i64} {
  func.func @seq2seq_kernel(%arg0: i32, %arg1: memref<64x1xi32, #tpu.memory_space<vmem>>, %arg2: memref<128x128xbf16, #tpu.memory_space<vmem>>, %arg3: memref<1x128xf32, #tpu.memory_space<vmem>>, %arg4: memref<128x128xbf16, #tpu.memory_space<vmem>>, %arg5: memref<1x128xf32, #tpu.memory_space<vmem>>, %arg6: memref<8x128xf32, #tpu.memory_space<vmem>>) attributes {dimension_semantics = [#tpu.dimension_semantics<parallel>], iteration_bounds = array<i64: 2>, scalar_prefetch = 0 : i64, scratch_operands = 0 : i64, tpu.core_type = #tpu.core_type<tc>, window_params = [{transform_indices = @transform_0, window_bounds = array<i64: 64, 1>}, {pipeline_mode = #tpu.pipeline_mode<synchronous>, transform_indices = @transform_1, window_bounds = array<i64: 128, 128>}, {pipeline_mode = #tpu.pipeline_mode<synchronous>, transform_indices = @transform_2, window_bounds = array<i64: 1, 128>}, {pipeline_mode = #tpu.pipeline_mode<synchronous>, transform_indices = @transform_3, window_bounds = array<i64: 128, 128>}, {pipeline_mode = #tpu.pipeline_mode<synchronous>, transform_indices = @transform_4, window_bounds = array<i64: 1, 128>}, {transform_indices = @transform_5, window_bounds = array<i64: 8, 128>}]} {
    %c0 = arith.constant 0 : index
    %c0_0 = arith.constant 0 : index
    %0 = vector.load %arg1[%c0, %c0_0] : memref<64x1xi32, #tpu.memory_space<vmem>>, vector<64x1xi32>
    %1 = tpu.iota {dimensions = array<i32: 1>} : vector<64x128xi32>
    %2 = vector.broadcast %0 : vector<64x1xi32> to vector<64x128xi32>
    %3 = arith.cmpi eq, %1, %2 : vector<64x128xi32>
    %cst = arith.constant 1.000000e+00 : f32
    %cst_1 = arith.constant 0.000000e+00 : f32
    %4 = vector.broadcast %cst : f32 to vector<64x128xf32>
    %5 = vector.broadcast %cst_1 : f32 to vector<64x128xf32>
    %6 = arith.select %3, %4, %5 : vector<64x128xi1>, vector<64x128xf32>
    %7 = arith.truncf %6 : vector<64x128xf32> to vector<64x128xbf16>
    %c0_2 = arith.constant 0 : index
    %c0_3 = arith.constant 0 : index
    %8 = vector.load %arg2[%c0_2, %c0_3] : memref<128x128xbf16, #tpu.memory_space<vmem>>, vector<128x128xbf16>
    %cst_4 = arith.constant dense<0.000000e+00> : vector<64x128xf32>
    %9 = tpu.matmul %7, %8, %cst_4 {dimension_numbers = #tpu.dot_dimension_numbers<[1], [0], [0], [1], [0, 0, 1, 1], [], []>} : vector<64x128xbf16>, vector<128x128xbf16>, vector<64x128xf32> -> vector<64x128xf32>
    %c0_5 = arith.constant 0 : index
    %c0_6 = arith.constant 0 : index
    %10 = vector.load %arg3[%c0_5, %c0_6] : memref<1x128xf32, #tpu.memory_space<vmem>>, vector<1x128xf32>
    %11 = vector.broadcast %10 : vector<1x128xf32> to vector<64x128xf32>
    %12 = arith.addf %9, %11 : vector<64x128xf32>
    %cst_7 = arith.constant 0.000000e+00 : f32
    %13 = vector.broadcast %cst_7 : f32 to vector<64x128xf32>
    %14 = arith.maximumf %12, %13 : vector<64x128xf32>
    %15 = vector.extract_strided_slice %14 {offsets = [0, 0], sizes = [8, 128], strides = [1, 1]} : vector<64x128xf32> to vector<8x128xf32>
    %16 = vector.extract_strided_slice %14 {offsets = [8, 0], sizes = [8, 128], strides = [1, 1]} : vector<64x128xf32> to vector<8x128xf32>
    %17 = arith.maximumf %15, %16 : vector<8x128xf32>
    %18 = vector.extract_strided_slice %14 {offsets = [16, 0], sizes = [8, 128], strides = [1, 1]} : vector<64x128xf32> to vector<8x128xf32>
    %19 = arith.maximumf %17, %18 : vector<8x128xf32>
    %20 = vector.extract_strided_slice %14 {offsets = [24, 0], sizes = [8, 128], strides = [1, 1]} : vector<64x128xf32> to vector<8x128xf32>
    %21 = arith.maximumf %19, %20 : vector<8x128xf32>
    %22 = vector.extract_strided_slice %14 {offsets = [32, 0], sizes = [8, 128], strides = [1, 1]} : vector<64x128xf32> to vector<8x128xf32>
    %23 = arith.maximumf %21, %22 : vector<8x128xf32>
    %24 = vector.extract_strided_slice %14 {offsets = [40, 0], sizes = [8, 128], strides = [1, 1]} : vector<64x128xf32> to vector<8x128xf32>
    %25 = arith.maximumf %23, %24 : vector<8x128xf32>
    %26 = vector.extract_strided_slice %14 {offsets = [48, 0], sizes = [8, 128], strides = [1, 1]} : vector<64x128xf32> to vector<8x128xf32>
    %27 = arith.maximumf %25, %26 : vector<8x128xf32>
    %28 = vector.extract_strided_slice %14 {offsets = [56, 0], sizes = [8, 128], strides = [1, 1]} : vector<64x128xf32> to vector<8x128xf32>
    %29 = arith.maximumf %27, %28 : vector<8x128xf32>
    %30 = arith.truncf %29 : vector<8x128xf32> to vector<8x128xbf16>
    %c0_8 = arith.constant 0 : index
    %c0_9 = arith.constant 0 : index
    %31 = vector.load %arg4[%c0_8, %c0_9] : memref<128x128xbf16, #tpu.memory_space<vmem>>, vector<128x128xbf16>
    %cst_10 = arith.constant dense<0.000000e+00> : vector<8x128xf32>
    %32 = tpu.matmul %30, %31, %cst_10 {dimension_numbers = #tpu.dot_dimension_numbers<[1], [0], [0], [1], [0, 0, 1, 1], [], []>} : vector<8x128xbf16>, vector<128x128xbf16>, vector<8x128xf32> -> vector<8x128xf32>
    %c0_11 = arith.constant 0 : index
    %c0_12 = arith.constant 0 : index
    %33 = vector.load %arg5[%c0_11, %c0_12] : memref<1x128xf32, #tpu.memory_space<vmem>>, vector<1x128xf32>
    %34 = vector.broadcast %33 : vector<1x128xf32> to vector<8x128xf32>
    %35 = arith.addf %32, %34 : vector<8x128xf32>
    %c0_13 = arith.constant 0 : index
    %c0_14 = arith.constant 0 : index
    %36 = vector.load %arg6[%c0_13, %c0_14] : memref<8x128xf32, #tpu.memory_space<vmem>>, vector<8x128xf32>
    tpu.vector_store %arg6[%c0_13, %c0_14], %35 {strides = array<i32>} : memref<8x128xf32, #tpu.memory_space<vmem>>, vector<8x128xf32>,
    return
  }
  func.func @transform_0(%arg0: i32) -> (i32, i32) {
    %c0_i32 = arith.constant 0 : i32
    %c0_i32_0 = arith.constant 0 : i32
    return %arg0, %c0_i32 : i32, i32
  }
  func.func @transform_1(%arg0: i32) -> (i32, i32) {
    %c0_i32 = arith.constant 0 : i32
    %c0_i32_0 = arith.constant 0 : i32
    %c0_i32_1 = arith.constant 0 : i32
    return %c0_i32, %c0_i32_0 : i32, i32
  }
  func.func @transform_2(%arg0: i32) -> (i32, i32) {
    %c0_i32 = arith.constant 0 : i32
    %c0_i32_0 = arith.constant 0 : i32
    %c0_i32_1 = arith.constant 0 : i32
    return %c0_i32, %c0_i32_0 : i32, i32
  }
  func.func @transform_3(%arg0: i32) -> (i32, i32) {
    %c0_i32 = arith.constant 0 : i32
    %c0_i32_0 = arith.constant 0 : i32
    %c0_i32_1 = arith.constant 0 : i32
    return %c0_i32, %c0_i32_0 : i32, i32
  }
  func.func @transform_4(%arg0: i32) -> (i32, i32) {
    %c0_i32 = arith.constant 0 : i32
    %c0_i32_0 = arith.constant 0 : i32
    %c0_i32_1 = arith.constant 0 : i32
    return %c0_i32, %c0_i32_0 : i32, i32
  }
  func.func @transform_5(%arg0: i32) -> (i32, i32) {
    %c0_i32 = arith.constant 0 : i32
    %c0_i32_0 = arith.constant 0 : i32
    return %arg0, %c0_i32 : i32, i32
  }
}

</mosaic_0001>

<llo_original>
// kernel: tpu_custom_call.1
$region0: #{tpu_custom_call.1}
  #allocation0 [shape = 'u32[]', space=smem, size = 0x4, offset = 0x4, fixed_abs, tag = 'smem constant byte address 0x4 - core index']
  #allocation1 [shape = 'u32[144,128]{1,0:T(1,128)}', space=vmem, size = 0x12000, scoped, tag = 'internal scratch']
  %s0 = inlined_call_operand.vmem [shape: s32[128,1], index: 0, kind: input, shape index: {}]
  %s1 = inlined_call_operand.vmem [shape: bf16[128,128], index: 1, kind: input, shape index: {}]
  %s2 = inlined_call_operand.vmem [shape: f32[1,128], index: 2, kind: input, shape index: {}]
  %s3 = inlined_call_operand.vmem [shape: bf16[128,128], index: 3, kind: input, shape index: {}]
  %s4 = inlined_call_operand.vmem [shape: f32[1,128], index: 4, kind: input, shape index: {}]
  %s5 = inlined_call_operand.hbm [shape: f32[16,128], index: 5, kind: output, shape index: {}]
  %s6 = sld [smem:[#allocation0]]
  $region53: #{tpu_custom_call.1} parent=0
    _
  %s8 = ssub.s32 1, %s6
  %s9 = scalar_select 0, %s8, %s6
  $region1: #{tpu_custom_call.1} parent=0
    #allocation2 [shape = 'u8[8192]{0}', space=vmem, size = 0x2000, scoped, tag = 'output window, operand 0']
    #allocation3 [shape = 's32[2]{0}', space=sflag, size = 0x8, scoped, tag = 'scoped memory for tpu_custom_call.1']
    %10 = vsyncpa [#allocation3], 0
    %s11 = scalar_lea.sflag [#allocation3], 1
    %12 = vsyncpa %s11, 0
    loop: start=0, step=1, limit=4
    $region2: #{tpu_custom_call.1} parent=1 // loop_pre_header
      _
    $region3: #{tpu_custom_call.1} parent=1 // loop_header
      %s14 = sphi 0, %s18
      %p15 = scmp.ge.s32.totalorder %s14, 4
      %s24 = sphi 0, %s26
      %s27 = sphi 0, %s24
      %s28 = sphi 0, %s27
      %s44 = sphi 0, %s28
      %s48 = sphi 0, %s48
      %s50 = sphi 0, %s48
      %s51 = sphi 0, %s50
      %s65 = sphi 0, %s51
      %s69 = sphi 0, %s69
      %s71 = sphi 0, %s69
      %s72 = sphi 0, %s71
      %s86 = sphi 0, %s72
      %s90 = sphi 0, %s90
      %s92 = sphi 0, %s90
      %s93 = sphi 0, %s92
      %s107 = sphi 0, %s93
      %s111 = sphi 0, %s111
      %s113 = sphi 0, %s111
      %s114 = sphi 0, %s113
      %s128 = sphi 0, %s114
      %s134 = sphi 0, %s136
      %s137 = sphi 0, %s134
      %s138 = sphi 0, %s137
      %s154 = sphi 0, %s138
    $region4: #{tpu_custom_call.1} parent=1 // loop_header_branch
      %17 = sbr.rel (%p15) target = $region8
    $region5: #{tpu_custom_call.1} parent=1 // loop_body
      %s19 = ssub.s32 %s14, 1
      %s20 = ssub.s32 %s14, 2
      %s21 = sadd.s32 %s14, 1
      %s22 = ssub.s32 %s14, %s21
      %p23 = scmp.eq.s32.totalorder %s22, 0
      %s25 = sadd.s32 %s24, 1
      %s26 = scalar_select %p23, %s24, %s25
      %p29 = pneg %p23
      %p30 = scmp.eq.s32.totalorder %s14, 1
      %p31 = por %p29, %p30
      %p32 = scmp.ne.s32.totalorder %s24, %s27
      %p33 = scmp.eq.s32.totalorder %s14, 0
      %p34 = por %p32, %p33
      %p35 = scmp.ne.s32.totalorder %s24, %s27
      %p36 = scmp.eq.s32.totalorder %s19, 1
      %p37 = por %p35, %p36
      %p38 = scmp.ne.s32.totalorder %s27, %s28
      %p39 = scmp.eq.s32.totalorder %s19, 0
      %p40 = por %p38, %p39
      %p41 = scmp.ne.s32.totalorder %s27, %s28
      %p42 = scmp.eq.s32.totalorder %s20, 1
      %p43 = por %p41, %p42
      %p45 = scmp.ne.s32.totalorder %s28, %s44
      %p46 = scmp.eq.s32.totalorder %s20, 0
      %p47 = por %p45, %p46
      %s49 = sadd.s32 %s48, 1
      %p52 = scmp.eq.s32.totalorder %s14, 1
      %p53 = scmp.ne.s32.totalorder %s48, %s50
      %p54 = scmp.eq.s32.totalorder %s14, 0
      %p55 = por %p53, %p54
      %p56 = scmp.ne.s32.totalorder %s48, %s50
      %p57 = scmp.eq.s32.totalorder %s19, 1
      %p58 = por %p56, %p57
      %p59 = scmp.ne.s32.totalorder %s50, %s51
      %p60 = scmp.eq.s32.totalorder %s19, 0
      %p61 = por %p59, %p60
      %p62 = scmp.ne.s32.totalorder %s50, %s51
      %p63 = scmp.eq.s32.totalorder %s20, 1
      %p64 = por %p62, %p63
      %p66 = scmp.ne.s32.totalorder %s51, %s65
      %p67 = scmp.eq.s32.totalorder %s20, 0
      %p68 = por %p66, %p67
      %s70 = sadd.s32 %s69, 1
      %p73 = scmp.eq.s32.totalorder %s14, 1
      %p74 = scmp.ne.s32.totalorder %s69, %s71
      %p75 = scmp.eq.s32.totalorder %s14, 0
      %p76 = por %p74, %p75
      %p77 = scmp.ne.s32.totalorder %s69, %s71
      %p78 = scmp.eq.s32.totalorder %s19, 1
      %p79 = por %p77, %p78
      %p80 = scmp.ne.s32.totalorder %s71, %s72
      %p81 = scmp.eq.s32.totalorder %s19, 0
      %p82 = por %p80, %p81
      %p83 = scmp.ne.s32.totalorder %s71, %s72
      %p84 = scmp.eq.s32.totalorder %s20, 1
      %p85 = por %p83, %p84
      %p87 = scmp.ne.s32.totalorder %s72, %s86
      %p88 = scmp.eq.s32.totalorder %s20, 0
      %p89 = por %p87, %p88
      %s91 = sadd.s32 %s90, 1
      %p94 = scmp.eq.s32.totalorder %s14, 1
      %p95 = scmp.ne.s32.totalorder %s90, %s92
      %p96 = scmp.eq.s32.totalorder %s14, 0
      %p97 = por %p95, %p96
      %p98 = scmp.ne.s32.totalorder %s90, %s92
      %p99 = scmp.eq.s32.totalorder %s19, 1
      %p100 = por %p98, %p99
      %p101 = scmp.ne.s32.totalorder %s92, %s93
      %p102 = scmp.eq.s32.totalorder %s19, 0
      %p103 = por %p101, %p102
      %p104 = scmp.ne.s32.totalorder %s92, %s93
      %p105 = scmp.eq.s32.totalorder %s20, 1
      %p106 = por %p104, %p105
      %p108 = scmp.ne.s32.totalorder %s93, %s107
      %p109 = scmp.eq.s32.totalorder %s20, 0
      %p110 = por %p108, %p109
      %s112 = sadd.s32 %s111, 1
      %p115 = scmp.eq.s32.totalorder %s14, 1
      %p116 = scmp.ne.s32.totalorder %s111, %s113
      %p117 = scmp.eq.s32.totalorder %s14, 0
      %p118 = por %p116, %p117
      %p119 = scmp.ne.s32.totalorder %s111, %s113
      %p120 = scmp.eq.s32.totalorder %s19, 1
      %p121 = por %p119, %p120
      %p122 = scmp.ne.s32.totalorder %s113, %s114
      %p123 = scmp.eq.s32.totalorder %s19, 0
      %p124 = por %p122, %p123
      %p125 = scmp.ne.s32.totalorder %s113, %s114
      %p126 = scmp.eq.s32.totalorder %s20, 1
      %p127 = por %p125, %p126
      %p129 = scmp.ne.s32.totalorder %s114, %s128
      %p130 = scmp.eq.s32.totalorder %s20, 0
      %p131 = por %p129, %p130
      %s132 = ssub.s32 %s14, %s21
      %p133 = scmp.eq.s32.totalorder %s132, 0
      %s135 = sadd.s32 %s134, 1
      %s136 = scalar_select %p133, %s134, %s135
      %p139 = pneg %p133
      %p140 = scmp.eq.s32.totalorder %s14, 1
      %p141 = por %p139, %p140
      %p142 = scmp.ne.s32.totalorder %s134, %s137
      %p143 = scmp.eq.s32.totalorder %s14, 0
      %p144 = por %p142, %p143
      %p145 = scmp.ne.s32.totalorder %s134, %s137
      %p146 = scmp.eq.s32.totalorder %s19, 1
      %p147 = por %p145, %p146
      %p148 = scmp.ne.s32.totalorder %s137, %s138
      %p149 = scmp.eq.s32.totalorder %s19, 0
      %p150 = por %p148, %p149
      %p151 = scmp.ne.s32.totalorder %s137, %s138
      %p152 = scmp.eq.s32.totalorder %s20, 1
      %p153 = por %p151, %p152
      %p155 = scmp.ne.s32.totalorder %s138, %s154
      %p156 = scmp.eq.s32.totalorder %s20, 0
      %p157 = por %p155, %p156
      %p158 = scmp.le.s32.totalorder 1, %s14
      %p159 = scmp.lt.s32.totalorder %s14, 3
      %p160 = pnand %p158, %p159
      %p161 = pneg %p160
      // Predicated region
      $region9: #{tpu_custom_call.1} parent=5 // pred_check
        _
      $region10: #{tpu_custom_call.1} parent=5 // pred_check_branch
        %163 = sbr.rel (%p160) target = $region12
      $region11: #{tpu_custom_call.1} parent=5 // pred_region
        %s164 = ssub.s32 %s14, 1
        // Predicated region
        $region13: #{tpu_custom_call.1} parent=11 // pred_check
          %p165 = pneg %p61
        $region14: #{tpu_custom_call.1} parent=11 // pred_check_branch
          %167 = sbr.rel (%p165) target = $region16
        $region15: #{tpu_custom_call.1} parent=11 // pred_region
          _
        $region16: #{tpu_custom_call.1} parent=11 // pred_fallthru
          _
        // Predicated region
        $region17: #{tpu_custom_call.1} parent=11 // pred_check
          %p168 = pneg %p82
        $region18: #{tpu_custom_call.1} parent=11 // pred_check_branch
          %170 = sbr.rel (%p168) target = $region20
        $region19: #{tpu_custom_call.1} parent=11 // pred_region
          _
        $region20: #{tpu_custom_call.1} parent=11 // pred_fallthru
          _
        // Predicated region
        $region21: #{tpu_custom_call.1} parent=11 // pred_check
          %p171 = pneg %p103
        $region22: #{tpu_custom_call.1} parent=11 // pred_check_branch
          %173 = sbr.rel (%p171) target = $region24
        $region23: #{tpu_custom_call.1} parent=11 // pred_region
          _
        $region24: #{tpu_custom_call.1} parent=11 // pred_fallthru
          _
        // Predicated region
        $region25: #{tpu_custom_call.1} parent=11 // pred_check
          %p174 = pneg %p124
        $region26: #{tpu_custom_call.1} parent=11 // pred_check_branch
          %176 = sbr.rel (%p174) target = $region28
        $region27: #{tpu_custom_call.1} parent=11 // pred_region
          _
        $region28: #{tpu_custom_call.1} parent=11 // pred_fallthru
          _
      $region12: #{tpu_custom_call.1} parent=5 // pred_fallthru
        _
      %p177 = scmp.lt.s32.totalorder %s14, 2
      // Predicated region
      $region29: #{tpu_custom_call.1} parent=5 // pred_check
        %p178 = pneg %p177
      $region30: #{tpu_custom_call.1} parent=5 // pred_check_branch
        %180 = sbr.rel (%p178) target = $region32
      $region31: #{tpu_custom_call.1} parent=5 // pred_region
        // Predicated region
        $region33: #{tpu_custom_call.1} parent=31 // pred_check
          %p181 = pneg %p34
        $region34: #{tpu_custom_call.1} parent=31 // pred_check_branch
          %183 = sbr.rel (%p181) target = $region36
        $region35: #{tpu_custom_call.1} parent=31 // pred_region
          %s184 = smul.u32 8, %s14
          %p185 = scmp.lt.s32.totalorder %s184, 15
          %s186 = scalar_select %p185, %s184, 15
          %s187 = smul.addr %s186, 8
          %s188 = scalar_lea.vmem %s0, %s187
          %s189 = smul.u32 8, %s14
        $region36: #{tpu_custom_call.1} parent=31 // pred_fallthru
          _
      $region32: #{tpu_custom_call.1} parent=5 // pred_fallthru
        _
      %p190 = scmp.le.s32.totalorder 1, %s14
      %p191 = scmp.lt.s32.totalorder %s14, 3
      %p192 = pnand %p190, %p191
      %p193 = pneg %p192
      // Predicated region
      $region37: #{tpu_custom_call.1} parent=5 // pred_check
        _
      $region38: #{tpu_custom_call.1} parent=5 // pred_check_branch
        %195 = sbr.rel (%p192) target = $region40
      $region39: #{tpu_custom_call.1} parent=5 // pred_region
        %s196 = ssub.s32 %s14, 1
        %s197 = smul.u32 8, %s19
        %p198 = scmp.lt.s32.totalorder %s197, 15
        %s199 = scalar_select %p198, %s197, 15
        %s200 = smul.addr %s199, 8
        %s201 = scalar_lea.vmem %s0, %s200
        %p202 = pneg %p40
        %p203 = pneg %p37
        %p204 = pneg %p61
        %p205 = pneg %p58
        %p206 = pneg %p82
        %p207 = pneg %p79
        %p208 = pneg %p103
        %p209 = pneg %p100
        %p210 = pneg %p124
        %p211 = pneg %p121
        %p212 = pneg %p150
        %p213 = pneg %p147
        %s214 = sand.u32 %s137, 1
        %s215 = scalar_lea.sflag [#allocation3], %s214
        %s216 = sand.u32 %s137, 1
        %s217 = smul.addr %s216, 8
        %s218 = scalar_lea.vmem [#allocation2], %s217
        %s219 = smul.u32 8, %s19
        %p220 = scmp.lt.s32.totalorder %s219, 15
        %s221 = scalar_select %p220, %s219, 15
        %s222 = smul.addr %s221, 8
        %s223 = scalar_lea.vmem %s0, %s222
        %s224 = smul.u32 8, %s19
        %v226 = vld [vmem:[%s223] sm:$0xff]
        %v227 = vld [vmem:[%s223 + $0x8] sm:$0xff]
        %v228 = vld [vmem:[%s223 + $0x10] sm:$0xff]
        %v229 = vld [vmem:[%s223 + $0x18] sm:$0xff]
        %v230 = vld [vmem:[%s223 + $0x20] sm:$0xff]
        %v231 = vld [vmem:[%s223 + $0x28] sm:$0xff]
        %v232 = vld [vmem:[%s223 + $0x30] sm:$0xff]
        %v233 = vld [vmem:[%s223 + $0x38] sm:$0xff]
        %v234 = vlaneseq
        %v235 = vand.u32 %v234, 127
        %236 = vset.pattern.permute.xlu0 0
        %237 = vperm.xlu0 %236, %v226
        %v238 = vpop.permute.xlu0 %237
        %239 = vset.pattern.permute.xlu0 0
        %240 = vperm.xlu0 %239, %v227
        %v241 = vpop.permute.xlu0 %240
        %242 = vset.pattern.permute.xlu0 0
        %243 = vperm.xlu0 %242, %v228
        %v244 = vpop.permute.xlu0 %243
        %245 = vset.pattern.permute.xlu0 0
        %246 = vperm.xlu0 %245, %v229
        %v247 = vpop.permute.xlu0 %246
        %248 = vset.pattern.permute.xlu0 0
        %249 = vperm.xlu0 %248, %v230
        %v250 = vpop.permute.xlu0 %249
        %251 = vset.pattern.permute.xlu0 0
        %252 = vperm.xlu0 %251, %v231
        %v253 = vpop.permute.xlu0 %252
        %254 = vset.pattern.permute.xlu0 0
        %255 = vperm.xlu0 %254, %v232
        %v256 = vpop.permute.xlu0 %255
        %257 = vset.pattern.permute.xlu0 0
        %258 = vperm.xlu0 %257, %v233
        %v259 = vpop.permute.xlu0 %258
        %vm260 = vcmp.eq.s32.totalorder %v235, %v238
        %vm261 = vcmp.eq.s32.totalorder %v235, %v241
        %vm262 = vcmp.eq.s32.totalorder %v235, %v244
        %vm263 = vcmp.eq.s32.totalorder %v235, %v247
        %vm264 = vcmp.eq.s32.totalorder %v235, %v250
        %vm265 = vcmp.eq.s32.totalorder %v235, %v253
        %vm266 = vcmp.eq.s32.totalorder %v235, %v256
        %vm267 = vcmp.eq.s32.totalorder %v235, %v259
        %v268 = vsel %vm260, 1.0, 0.0
        %v269 = vsel %vm261, 1.0, 0.0
        %v270 = vsel %vm262, 1.0, 0.0
        %v271 = vsel %vm263, 1.0, 0.0
        %v272 = vsel %vm264, 1.0, 0.0
        %v273 = vsel %vm265, 1.0, 0.0
        %v274 = vsel %vm266, 1.0, 0.0
        %v275 = vsel %vm267, 1.0, 0.0
        %v276 = vpack.c.bf16 %v269, %v268
        %v277 = vpack.c.bf16 %v271, %v270
        %v278 = vpack.c.bf16 %v273, %v272
        %v279 = vpack.c.bf16 %v275, %v274
        %v280 = vld [vmem:[%s1] sm:$0xf]
        %v281 = vld [vmem:[%s1 + $0x4] sm:$0xf]
        %v282 = vld [vmem:[%s1 + $0x8] sm:$0xf]
        %v283 = vld [vmem:[%s1 + $0xc] sm:$0xf]
        %v284 = vld [vmem:[%s1 + $0x10] sm:$0xf]
        %v285 = vld [vmem:[%s1 + $0x14] sm:$0xf]
        %v286 = vld [vmem:[%s1 + $0x18] sm:$0xf]
        %v287 = vld [vmem:[%s1 + $0x1c] sm:$0xf]
        %v288 = vld [vmem:[%s1 + $0x20] sm:$0xf]
        %v289 = vld [vmem:[%s1 + $0x24] sm:$0xf]
        %v290 = vld [vmem:[%s1 + $0x28] sm:$0xf]
        %v291 = vld [vmem:[%s1 + $0x2c] sm:$0xf]
        %v292 = vld [vmem:[%s1 + $0x30] sm:$0xf]
        %v293 = vld [vmem:[%s1 + $0x34] sm:$0xf]
        %v294 = vld [vmem:[%s1 + $0x38] sm:$0xf]
        %v295 = vld [vmem:[%s1 + $0x3c] sm:$0xf]
        %v296 = vld [vmem:[%s2] sm:$0x1]
        %v298 = vlaneseq
        %v299 = vshrl.u32 %v298, 7
        %v300 = vsub.s32 0, %v299
        %v301 = vrot.slane %v296, %v300
        %v319 = vunpack.c.l.b16 %v280
        %v320 = vunpack.c.l.b16 %v281
        %v321 = vunpack.c.l.b16 %v282
        %v322 = vunpack.c.l.b16 %v283
        %v323 = vunpack.c.l.b16 %v284
        %v324 = vunpack.c.l.b16 %v285
        %v325 = vunpack.c.l.b16 %v286
        %v326 = vunpack.c.l.b16 %v287
        %v327 = vunpack.c.l.b16 %v288
        %v328 = vunpack.c.l.b16 %v289
        %v329 = vunpack.c.l.b16 %v290
        %v330 = vunpack.c.l.b16 %v291
        %v331 = vunpack.c.l.b16 %v292
        %v332 = vunpack.c.l.b16 %v293
        %v333 = vunpack.c.l.b16 %v294
        %v334 = vunpack.c.l.b16 %v295
        %v335 = vpack.c.b16 %v320, %v319
        %v336 = vpack.c.b16 %v322, %v321
        %v337 = vpack.c.b16 %v324, %v323
        %v338 = vpack.c.b16 %v326, %v325
        %v339 = vpack.c.b16 %v328, %v327
        %v340 = vpack.c.b16 %v330, %v329
        %v341 = vpack.c.b16 %v332, %v331
        %v342 = vpack.c.b16 %v334, %v333
        %351 = vmatprep.subr.bf16.mxu0 0
        %352 = vmatpush1.bf16.msra.mxu0 %v342
        %353 = vmatprep.subr.bf16.mxu0 0
        %354 = vmatpush1.bf16.msra.mxu0 %v341
        %355 = vmatprep.subr.bf16.mxu0 0
        %356 = vmatpush1.bf16.msra.mxu0 %v340
        %357 = vmatprep.subr.bf16.mxu0 0
        %358 = vmatpush1.bf16.msra.mxu0 %v339
        %359 = vmatprep.subr.bf16.mxu0 0
        %360 = vmatpush1.bf16.msra.mxu0 %v338
        %361 = vmatprep.subr.bf16.mxu0 0
        %362 = vmatpush1.bf16.msra.mxu0 %v337
        %363 = vmatprep.subr.bf16.mxu0 0
        %364 = vmatpush1.bf16.msra.mxu0 %v336
        %365 = vmatprep.subr.bf16.mxu0 0
        %366 = vmatpush1.bf16.msra.mxu0 %v335
        %367 = vmatprep.subr.bf16.mxu0 0
        %368 = vmatpush2.bf16.msra.mxu0 0
        %369 = vmatprep.subr.bf16.mxu0 0
        %370 = vmatpush2.bf16.msra.mxu0 0
        %371 = vmatprep.subr.bf16.mxu0 0
        %372 = vmatpush2.bf16.msra.mxu0 0
        %373 = vmatprep.subr.bf16.mxu0 0
        %374 = vmatpush2.bf16.msra.mxu0 0
        %375 = vmatprep.subr.bf16.mxu0 0
        %376 = vmatpush2.bf16.msra.mxu0 0
        %377 = vmatprep.subr.bf16.mxu0 0
        %378 = vmatpush2.bf16.msra.mxu0 0
        %379 = vmatprep.subr.bf16.mxu0 0
        %380 = vmatpush2.bf16.msra.mxu0 0
        %381 = vmatprep.subr.bf16.mxu0 0
        %382 = vmatpush2.bf16.msra.mxu0 0
        %383 = vmatprep.mubr.bf16.mxu0 0
        %384 = vmatmul.mubr.bf16.gmra.mxu0 %v276
        %v385 = vpop.f32.mrf.mxu0
        %v386 = vadd.f32 %v301, %v385
        %v387 = vpop.f32.mrf.mxu0
        %v388 = vpop.f32.mrf.mxu0
        %v389 = vadd.f32 %v301, %v388
        %v390 = vpop.f32.mrf.mxu0
        %391 = vmatprep.mubr.bf16.mxu0 0
        %392 = vmatmul.mubr.bf16.gmra.mxu0 %v277
        %v393 = vpop.f32.mrf.mxu0
        %v394 = vadd.f32 %v301, %v393
        %v395 = vpop.f32.mrf.mxu0
        %v396 = vpop.f32.mrf.mxu0
        %v397 = vadd.f32 %v301, %v396
        %v398 = vpop.f32.mrf.mxu0
        %399 = vmatprep.mubr.bf16.mxu0 0
        %400 = vmatmul.mubr.bf16.gmra.mxu0 %v278
        %v401 = vpop.f32.mrf.mxu0
        %v402 = vadd.f32 %v301, %v401
        %v403 = vpop.f32.mrf.mxu0
        %v404 = vpop.f32.mrf.mxu0
        %v405 = vadd.f32 %v301, %v404
        %v406 = vpop.f32.mrf.mxu0
        %407 = vmatprep.mubr.bf16.mxu0 0
        %408 = vmatmul.mubr.bf16.gmra.mxu0 %v279
        %v409 = vpop.f32.mrf.mxu0
        %v410 = vadd.f32 %v301, %v409
        %v411 = vpop.f32.mrf.mxu0
        %v412 = vpop.f32.mrf.mxu0
        %v413 = vadd.f32 %v301, %v412
        %v414 = vpop.f32.mrf.mxu0
        %415 = vdwg.mxu0
        %v416 = vmax.f32 %v386, 0.0
        %v417 = vmax.f32 %v389, 0.0
        %v418 = vmax.f32 %v394, 0.0
        %v419 = vmax.f32 %v397, 0.0
        %v420 = vmax.f32 %v402, 0.0
        %v421 = vmax.f32 %v405, 0.0
        %v422 = vmax.f32 %v410, 0.0
        %v423 = vmax.f32 %v413, 0.0
        %v424 = vmax.f32 %v416, %v417
        %v425 = vmax.f32 %v424, %v418
        %v426 = vmax.f32 %v425, %v419
        %v427 = vmax.f32 %v426, %v420
        %v428 = vmax.f32 %v427, %v421
        %v429 = vmax.f32 %v428, %v422
        %v430 = vmax.f32 %v429, %v423
        %v431 = vpack.c.bf16 %v430, %v430
        %v432 = vld [vmem:[%s3] sm:$0xf]
        %v433 = vld [vmem:[%s3 + $0x4] sm:$0xf]
        %v434 = vld [vmem:[%s3 + $0x8] sm:$0xf]
        %v435 = vld [vmem:[%s3 + $0xc] sm:$0xf]
        %v436 = vld [vmem:[%s3 + $0x10] sm:$0xf]
        %v437 = vld [vmem:[%s3 + $0x14] sm:$0xf]
        %v438 = vld [vmem:[%s3 + $0x18] sm:$0xf]
        %v439 = vld [vmem:[%s3 + $0x1c] sm:$0xf]
        %v440 = vld [vmem:[%s3 + $0x20] sm:$0xf]
        %v441 = vld [vmem:[%s3 + $0x24] sm:$0xf]
        %v442 = vld [vmem:[%s3 + $0x28] sm:$0xf]
        %v443 = vld [vmem:[%s3 + $0x2c] sm:$0xf]
        %v444 = vld [vmem:[%s3 + $0x30] sm:$0xf]
        %v445 = vld [vmem:[%s3 + $0x34] sm:$0xf]
        %v446 = vld [vmem:[%s3 + $0x38] sm:$0xf]
        %v447 = vld [vmem:[%s3 + $0x3c] sm:$0xf]
        %v448 = vld [vmem:[%s4] sm:$0x1]
        %v450 = vlaneseq
        %v451 = vshrl.u32 %v450, 7
        %v452 = vsub.s32 0, %v451
        %v453 = vrot.slane %v448, %v452
        %v471 = vunpack.c.l.b16 %v432
        %v472 = vunpack.c.l.b16 %v433
        %v473 = vunpack.c.l.b16 %v434
        %v474 = vunpack.c.l.b16 %v435
        %v475 = vunpack.c.l.b16 %v436
        %v476 = vunpack.c.l.b16 %v437
        %v477 = vunpack.c.l.b16 %v438
        %v478 = vunpack.c.l.b16 %v439
        %v479 = vunpack.c.l.b16 %v440
        %v480 = vunpack.c.l.b16 %v441
        %v481 = vunpack.c.l.b16 %v442
        %v482 = vunpack.c.l.b16 %v443
        %v483 = vunpack.c.l.b16 %v444
        %v484 = vunpack.c.l.b16 %v445
        %v485 = vunpack.c.l.b16 %v446
        %v486 = vunpack.c.l.b16 %v447
        %v487 = vpack.c.b16 %v472, %v471
        %v488 = vpack.c.b16 %v474, %v473
        %v489 = vpack.c.b16 %v476, %v475
        %v490 = vpack.c.b16 %v478, %v477
        %v491 = vpack.c.b16 %v480, %v479
        %v492 = vpack.c.b16 %v482, %v481
        %v493 = vpack.c.b16 %v484, %v483
        %v494 = vpack.c.b16 %v486, %v485
        %503 = vmatprep.subr.bf16.mxu0 0
        %504 = vmatpush1.bf16.msra.mxu0 %v494
        %505 = vmatprep.subr.bf16.mxu0 0
        %506 = vmatpush1.bf16.msra.mxu0 %v493
        %507 = vmatprep.subr.bf16.mxu0 0
        %508 = vmatpush1.bf16.msra.mxu0 %v492
        %509 = vmatprep.subr.bf16.mxu0 0
        %510 = vmatpush1.bf16.msra.mxu0 %v491
        %511 = vmatprep.subr.bf16.mxu0 0
        %512 = vmatpush1.bf16.msra.mxu0 %v490
        %513 = vmatprep.subr.bf16.mxu0 0
        %514 = vmatpush1.bf16.msra.mxu0 %v489
        %515 = vmatprep.subr.bf16.mxu0 0
        %516 = vmatpush1.bf16.msra.mxu0 %v488
        %517 = vmatprep.subr.bf16.mxu0 0
        %518 = vmatpush1.bf16.msra.mxu0 %v487
        %519 = vmatprep.subr.bf16.mxu0 0
        %520 = vmatpush2.bf16.msra.mxu0 0
        %521 = vmatprep.subr.bf16.mxu0 0
        %522 = vmatpush2.bf16.msra.mxu0 0
        %523 = vmatprep.subr.bf16.mxu0 0
        %524 = vmatpush2.bf16.msra.mxu0 0
        %525 = vmatprep.subr.bf16.mxu0 0
        %526 = vmatpush2.bf16.msra.mxu0 0
        %527 = vmatprep.subr.bf16.mxu0 0
        %528 = vmatpush2.bf16.msra.mxu0 0
        %529 = vmatprep.subr.bf16.mxu0 0
        %530 = vmatpush2.bf16.msra.mxu0 0
        %531 = vmatprep.subr.bf16.mxu0 0
        %532 = vmatpush2.bf16.msra.mxu0 0
        %533 = vmatprep.subr.bf16.mxu0 0
        %534 = vmatpush2.bf16.msra.mxu0 0
        %535 = vmatprep.mubr.bf16.mxu0 0
        %536 = vmatmul.mubr.bf16.gmra.mxu0 %v431
        %v537 = vpop.f32.mrf.mxu0
        %v538 = vadd.f32 %v453, %v537
        %v539 = vpop.f32.mrf.mxu0
        %v540 = vpop.f32.mrf.mxu0
        %v541 = vpop.f32.mrf.mxu0
        %542 = vdwg.mxu0
        %543 = vst [vmem:[%s218] sm:$0xff] %v538
        %s544 = sand.u32 %s137, 1
        %s545 = scalar_lea.sflag [#allocation3], %s544
        %s546 = sand.u32 %s137, 1
        %s547 = smul.addr %s546, 8
        %s548 = scalar_lea.vmem [#allocation2], %s547
        // Predicated region
        $region41: #{tpu_custom_call.1} parent=39 // pred_check
          %p549 = pneg %p147
        $region42: #{tpu_custom_call.1} parent=39 // pred_check_branch
          %551 = sbr.rel (%p549) target = $region44
        $region43: #{tpu_custom_call.1} parent=39 // pred_region
          %s553 = ssub.s32 128, 128
          %554 = vsyncadd %s545, %s553
          %s555 = smul.addr %s19, 128
          %s556 = scalar_lea.hbm %s5, %s555
          %s558 = sshll.u32 %s548, 4
          %s559 = int_to_ptr.vmem [resolvable:$true] %s558
          %561 = dma.vmem_to_hbm [thread:$0]  %s559, 128, %s556, %s545
        $region44: #{tpu_custom_call.1} parent=39 // pred_fallthru
          _
      $region40: #{tpu_custom_call.1} parent=5 // pred_fallthru
        _
      %p562 = scmp.le.s32.totalorder 2, %s14
      // Predicated region
      $region45: #{tpu_custom_call.1} parent=5 // pred_check
        %p563 = pneg %p562
      $region46: #{tpu_custom_call.1} parent=5 // pred_check_branch
        %565 = sbr.rel (%p563) target = $region48
      $region47: #{tpu_custom_call.1} parent=5 // pred_region
        %s566 = ssub.s32 %s14, 2
        // Predicated region
        $region49: #{tpu_custom_call.1} parent=47 // pred_check
          %p567 = pneg %p153
        $region50: #{tpu_custom_call.1} parent=47 // pred_check_branch
          %569 = sbr.rel (%p567) target = $region52
        $region51: #{tpu_custom_call.1} parent=47 // pred_region
          %s570 = sand.u32 %s138, 1
          %s571 = scalar_lea.sflag [#allocation3], %s570
          %s572 = sand.u32 %s138, 1
          %s573 = smul.addr %s572, 8
          %s574 = scalar_lea.vmem [#allocation2], %s573
          %575 = dma.done %s571, 128
        $region52: #{tpu_custom_call.1} parent=47 // pred_fallthru
          _
      $region48: #{tpu_custom_call.1} parent=5 // pred_fallthru
        _
    $region6: #{tpu_custom_call.1} parent=1 // loop_footer
      %s18 = sadd.s32 1, %s14
    $region7: #{tpu_custom_call.1} parent=1 // loop_footer_branch
      %13 = sbr.rel target = $region3
    $region8: #{tpu_custom_call.1} parent=1 // loop_exit
      _
    %576 = vsyncpa [#allocation3], 1
    %s577 = scalar_lea.sflag [#allocation3], 1
    %578 = vsyncpa %s577, 1

</llo_original>
